<compile_context>
chip_gen: v7x
topology: tpu7x:2x2x1
jax: 0.10.0
libtpu: 0.0.40
codegen_flags: <defaults>
</compile_context>

<pallas_src>
import functools

import jax
import jax.numpy as jnp
from jax.experimental import pallas as pl
from jax.experimental.pallas import tpu as pltpu


_VMEM_LIMIT_BYTES = 32 * 1024 * 1024   # explicit scoped-VMEM cap (v5e default is only 16 MiB)
_FUSE_BYTES = 4 * 1024 * 1024          # fused single-kernel path threshold (f32 working set)
_HW_TARGET_POOL = 8192                 # pass-1 lane-tile target (input only is double-buffered)
_HW_TARGET_SCALE = 4096                # pass-2 lane-tile target (input + output double-buffered)
_ROW_TARGET = 256


def _round_up(x, m):
    return (x + m - 1) // m * m


def _pick_hw_tile(hw, target):
    """Lane tile: multiple of 128, <= target, wasting < 128 lanes of padding."""
    nb = max(1, -(-hw // target))
    return _round_up(-(-hw // nb), 128)


def _pick_row_tile(rows, target=_ROW_TARGET):
    """Row tile: multiple of 8, aiming for >= 2 row blocks (v7x megacore)."""
    nb = max(2, -(-rows // target))
    return _round_up(max(1, -(-rows // nb)), 8)


def _sigmoid(z):
    return 1.0 / (1.0 + jnp.exp(-z))


# ---------------------------------------------------------------------------
# Fused single-kernel path (small feature maps): x stays resident in VMEM.
# ---------------------------------------------------------------------------
def _fused_kernel(x_ref, w1_ref, w2_ref, o_ref, *, hw):
    x = x_ref[...].astype(jnp.float32)                 # (B, C, HW)
    avg = jnp.sum(x, axis=-1) * (1.0 / hw)             # (B, C)
    mx = jnp.max(x, axis=-1)                           # (B, C)

    w1 = w1_ref[...].astype(jnp.float32)               # (Cr, C)
    w2 = w2_ref[...].astype(jnp.float32)               # (C, Cr)

    def mlp(v):                                        # (B, C) -> (B, C), VPU/XLU only
        h = jnp.maximum(jnp.sum(v[:, None, :] * w1[None, :, :], axis=-1), 0.0)  # (B, Cr)
        return jnp.sum(h[:, None, :] * w2[None, :, :], axis=-1)                 # (B, C)

    attn = _sigmoid(mlp(avg) * mlp(mx))                # (B, C)
    o_ref[...] = (x * attn[:, :, None]).astype(o_ref.dtype)


# ---------------------------------------------------------------------------
# Pass 1: streaming global sum/max pooling over the HW (lane) axis.
# ---------------------------------------------------------------------------
def _pool_kernel(x_ref, stats_ref, *, hw, hw_tile, mask_last):
    j = pl.program_id(1)
    x = x_ref[...].astype(jnp.float32)                 # (row_tile, hw_tile)

    def _reduce_plain():
        return (jnp.sum(x, axis=-1, keepdims=True),
                jnp.max(x, axis=-1, keepdims=True))

    if mask_last:
        # Only the last HW tile contains out-of-bounds lanes (unspecified data):
        # mask them to 0 for the sum and -inf for the max. Interior tiles take
        # the cheap branch (no iota / compare / select).
        def _reduce_masked():
            col = jax.lax.broadcasted_iota(jnp.int32, x.shape, 1) + j * hw_tile
            valid = col < hw
            return (jnp.sum(jnp.where(valid, x, 0.0), axis=-1, keepdims=True),
                    jnp.max(jnp.where(valid, x, -jnp.inf), axis=-1, keepdims=True))

        part_sum, part_max = jax.lax.cond(
            j == pl.num_programs(1) - 1, _reduce_masked, _reduce_plain)
    else:
        part_sum, part_max = _reduce_plain()

    @pl.when(j == 0)
    def _():
        stats_ref[:, 0:1] = part_sum
        stats_ref[:, 1:2] = part_max

    @pl.when(j != 0)
    def _():
        stats_ref[:, 0:1] = stats_ref[:, 0:1] + part_sum
        stats_ref[:, 1:2] = jnp.maximum(stats_ref[:, 1:2], part_max)


# ---------------------------------------------------------------------------
# Pass 2: lane-dense rescale out = x * attn[row].
# ---------------------------------------------------------------------------
def _scale_kernel(x_ref, attn_ref, o_ref):
    o_ref[...] = (x_ref[...].astype(jnp.float32) * attn_ref[...]).astype(o_ref.dtype)


@jax.jit
def cbam_forward(x_nchw, w_fc1, w_fc2):
    B, C, H, W = x_nchw.shape
    HW = H * W
    R = B * C

    # ---- fused path for small feature maps --------------------------------
    if R * HW * 4 <= _FUSE_BYTES:
        x3 = x_nchw.reshape(B, C, HW)
        out = pl.pallas_call(
            functools.partial(_fused_kernel, hw=HW),
            out_shape=jax.ShapeDtypeStruct((B, C, HW), x_nchw.dtype),
            grid_spec=pltpu.PrefetchScalarGridSpec(
                num_scalar_prefetch=0,
                grid=(1,),
                in_specs=[
                    pl.BlockSpec((B, C, HW), lambda i: (0, 0, 0)),
                    pl.BlockSpec(w_fc1.shape, lambda i: (0, 0)),
                    pl.BlockSpec(w_fc2.shape, lambda i: (0, 0)),
                ],
                out_specs=pl.BlockSpec((B, C, HW), lambda i: (0, 0, 0)),
            ),
            compiler_params=pltpu.CompilerParams(
                dimension_semantics=("arbitrary",),
                vmem_limit_bytes=_VMEM_LIMIT_BYTES),
        )(x3, w_fc1, w_fc2)
        return out.reshape(B, C, H, W)

    # ---- streaming two-pass path -------------------------------------------
    x2 = x_nchw.reshape(R, HW)                      # free reshape, no padding
    row_tile = _pick_row_tile(R)

    # pass 1: tiled global sum/max pooling
    hw_tile1 = _pick_hw_tile(HW, _HW_TARGET_POOL)
    stats = pl.pallas_call(
        functools.partial(_pool_kernel, hw=HW, hw_tile=hw_tile1,
                          mask_last=(HW % hw_tile1 != 0)),
        out_shape=jax.ShapeDtypeStruct((R, 2), jnp.float32),
        grid_spec=pltpu.PrefetchScalarGridSpec(
            num_scalar_prefetch=0,
            grid=(pl.cdiv(R, row_tile), pl.cdiv(HW, hw_tile1)),
            in_specs=[pl.BlockSpec((row_tile, hw_tile1), lambda i, j: (i, j))],
            out_specs=pl.BlockSpec((row_tile, 2), lambda i, j: (i, 0)),
        ),
        compiler_params=pltpu.CompilerParams(
            dimension_semantics=("parallel", "arbitrary"),
            vmem_limit_bytes=_VMEM_LIMIT_BYTES),
    )(x2)

    # shared MLP on pooled (B, C) stats: one batched matmul (plain JAX)
    sums = stats[:, 0].reshape(B, C)
    maxs = stats[:, 1].reshape(B, C)
    avg = sums * (1.0 / HW)

    pooled = jnp.concatenate([avg, maxs], axis=0)                  # (2B, C), f32
    h = jnp.maximum(pooled @ w_fc1.astype(jnp.float32).T, 0.0)     # (2B, C//r)
    o = h @ w_fc2.astype(jnp.float32).T                            # (2B, C)
    attn_rows = jax.nn.sigmoid(o[:B] * o[B:]).reshape(R, 1)        # (R, 1), f32

    # pass 2: lane-dense elementwise rescale
    hw_tile2 = _pick_hw_tile(HW, _HW_TARGET_SCALE)
    out = pl.pallas_call(
        _scale_kernel,
        out_shape=jax.ShapeDtypeStruct((R, HW), x_nchw.dtype),
        grid_spec=pltpu.PrefetchScalarGridSpec(
            num_scalar_prefetch=0,
            grid=(pl.cdiv(R, row_tile), pl.cdiv(HW, hw_tile2)),
            in_specs=[
                pl.BlockSpec((row_tile, hw_tile2), lambda i, j: (i, j)),
                pl.BlockSpec((row_tile, 1), lambda i, j: (i, 0)),
            ],
            out_specs=pl.BlockSpec((row_tile, hw_tile2), lambda i, j: (i, j)),
        ),
        compiler_params=pltpu.CompilerParams(
            dimension_semantics=("parallel", "parallel"),
            vmem_limit_bytes=_VMEM_LIMIT_BYTES),
    )(x2, attn_rows)

    return out.reshape(B, C, H, W)


def cbam_reference(x, w_fc1, w_fc2):
    # Pure-JAX reference matching the PyTorch forward.
    avg = jnp.mean(x, axis=(2, 3))            # (B, C)
    mx = jnp.max(x, axis=(2, 3))              # (B, C)

    def mlp(v):
        h = jnp.maximum(v @ w_fc1.T, 0.0)     # fc1: (C//r, C) 1x1 conv, no bias
        return h @ w_fc2.T                    # fc2: (C, C//r) 1x1 conv, no bias

    attn = jax.nn.sigmoid(mlp(avg) * mlp(mx))[:, :, None, None]
    return x * attn


if __name__ == "__main__":
    def run_case(B, C, H, W, ratio, key):
        Cr = C // ratio
        kx, k1, k2 = jax.random.split(key, 3)
        x = jax.random.normal(kx, (B, C, H, W), dtype=jnp.float32)
        # PyTorch 1x1-conv weights (out, in, 1, 1) stored squeezed as (out, in).
        w_fc1 = 0.3 * jax.random.normal(k1, (Cr, C), dtype=jnp.float32)
        w_fc2 = 0.3 * jax.random.normal(k2, (C, Cr), dtype=jnp.float32)

        out = jax.block_until_ready(cbam_forward(x, w_fc1, w_fc2))
        ref = cbam_reference(x, w_fc1, w_fc2)
        assert out.shape == (B, C, H, W)
        max_err = float(jnp.max(jnp.abs(out - ref)))
        assert jnp.allclose(out, ref, atol=1e-4, rtol=1e-4), max_err

    key = jax.random.PRNGKey(0)
    k_small, k_large = jax.random.split(key)
    # Small config (module defaults): fused single-kernel path.
    run_case(2, 8, 16, 16, 2, k_small)
    # Larger config: two-pass streaming path with ragged (masked) last HW tile.
    run_case(4, 32, 95, 95, 4, k_large)
    print("KERNEL_OK")
</pallas_src>

<mosaic_0001>
module attributes {stable_mosaic.version = 11 : i64} {
  func.func @_fused_kernel(%arg0: i32, %arg1: memref<2x8x256xf32, #tpu.memory_space<vmem>>, %arg2: memref<4x8xf32, #tpu.memory_space<vmem>>, %arg3: memref<8x4xf32, #tpu.memory_space<vmem>>, %arg4: memref<2x8x256xf32, #tpu.memory_space<vmem>>) attributes {dimension_semantics = [#tpu.dimension_semantics<arbitrary>], iteration_bounds = array<i64: 1>, scalar_prefetch = 0 : i64, scratch_operands = 0 : i64, tpu.core_type = #tpu.core_type<tc>, window_params = [{pipeline_mode = #tpu.pipeline_mode<synchronous>, transform_indices = @transform_0, window_bounds = array<i64: 2, 8, 256>}, {pipeline_mode = #tpu.pipeline_mode<synchronous>, transform_indices = @transform_1, window_bounds = array<i64: 4, 8>}, {pipeline_mode = #tpu.pipeline_mode<synchronous>, transform_indices = @transform_2, window_bounds = array<i64: 8, 4>}, {pipeline_mode = #tpu.pipeline_mode<synchronous>, transform_indices = @transform_3, window_bounds = array<i64: 2, 8, 256>}]} {
    %c0 = arith.constant 0 : index
    %c0_0 = arith.constant 0 : index
    %c0_1 = arith.constant 0 : index
    %0 = vector.load %arg1[%c0, %c0_0, %c0_1] : memref<2x8x256xf32, #tpu.memory_space<vmem>>, vector<2x8x256xf32>
    %cst = arith.constant dense<0.000000e+00> : vector<2x8xf32>
    %1 = vector.multi_reduction <add>, %0, %cst [2] : vector<2x8x256xf32> to vector<2x8xf32>
    %cst_2 = arith.constant 3.906250e-03 : f32
    %2 = vector.broadcast %cst_2 : f32 to vector<2x8xf32>
    %3 = arith.mulf %1, %2 : vector<2x8xf32>
    %cst_3 = arith.constant dense<0xFF800000> : vector<2x8xf32>
    %4 = vector.multi_reduction <maximumf>, %0, %cst_3 [2] : vector<2x8x256xf32> to vector<2x8xf32>
    %c0_4 = arith.constant 0 : index
    %c0_5 = arith.constant 0 : index
    %5 = vector.load %arg2[%c0_4, %c0_5] : memref<4x8xf32, #tpu.memory_space<vmem>>, vector<4x8xf32>
    %c0_6 = arith.constant 0 : index
    %c0_7 = arith.constant 0 : index
    %6 = vector.load %arg3[%c0_6, %c0_7] : memref<8x4xf32, #tpu.memory_space<vmem>>, vector<8x4xf32>
    %7 = vector.shape_cast %3 : vector<2x8xf32> to vector<2x1x8xf32>
    %8 = vector.shape_cast %5 : vector<4x8xf32> to vector<1x4x8xf32>
    %9 = vector.broadcast %7 : vector<2x1x8xf32> to vector<2x4x8xf32>
    %10 = vector.broadcast %8 : vector<1x4x8xf32> to vector<2x4x8xf32>
    %11 = arith.mulf %9, %10 : vector<2x4x8xf32>
    %cst_8 = arith.constant dense<0.000000e+00> : vector<2x4xf32>
    %12 = vector.multi_reduction <add>, %11, %cst_8 [2] : vector<2x4x8xf32> to vector<2x4xf32>
    %cst_9 = arith.constant 0.000000e+00 : f32
    %13 = vector.broadcast %cst_9 : f32 to vector<2x4xf32>
    %14 = arith.maximumf %12, %13 : vector<2x4xf32>
    %15 = vector.shape_cast %14 : vector<2x4xf32> to vector<2x1x4xf32>
    %16 = vector.shape_cast %6 : vector<8x4xf32> to vector<1x8x4xf32>
    %17 = vector.broadcast %15 : vector<2x1x4xf32> to vector<2x8x4xf32>
    %18 = vector.broadcast %16 : vector<1x8x4xf32> to vector<2x8x4xf32>
    %19 = arith.mulf %17, %18 : vector<2x8x4xf32>
    %cst_10 = arith.constant dense<0.000000e+00> : vector<2x8xf32>
    %20 = vector.multi_reduction <add>, %19, %cst_10 [2] : vector<2x8x4xf32> to vector<2x8xf32>
    %21 = vector.shape_cast %4 : vector<2x8xf32> to vector<2x1x8xf32>
    %22 = vector.shape_cast %5 : vector<4x8xf32> to vector<1x4x8xf32>
    %23 = vector.broadcast %21 : vector<2x1x8xf32> to vector<2x4x8xf32>
    %24 = vector.broadcast %22 : vector<1x4x8xf32> to vector<2x4x8xf32>
    %25 = arith.mulf %23, %24 : vector<2x4x8xf32>
    %cst_11 = arith.constant dense<0.000000e+00> : vector<2x4xf32>
    %26 = vector.multi_reduction <add>, %25, %cst_11 [2] : vector<2x4x8xf32> to vector<2x4xf32>
    %cst_12 = arith.constant 0.000000e+00 : f32
    %27 = vector.broadcast %cst_12 : f32 to vector<2x4xf32>
    %28 = arith.maximumf %26, %27 : vector<2x4xf32>
    %29 = vector.shape_cast %28 : vector<2x4xf32> to vector<2x1x4xf32>
    %30 = vector.shape_cast %6 : vector<8x4xf32> to vector<1x8x4xf32>
    %31 = vector.broadcast %29 : vector<2x1x4xf32> to vector<2x8x4xf32>
    %32 = vector.broadcast %30 : vector<1x8x4xf32> to vector<2x8x4xf32>
    %33 = arith.mulf %31, %32 : vector<2x8x4xf32>
    %cst_13 = arith.constant dense<0.000000e+00> : vector<2x8xf32>
    %34 = vector.multi_reduction <add>, %33, %cst_13 [2] : vector<2x8x4xf32> to vector<2x8xf32>
    %35 = arith.mulf %20, %34 : vector<2x8xf32>
    %cst_14 = arith.constant 0.000000e+00 : f32
    %36 = vector.broadcast %cst_14 : f32 to vector<2x8xf32>
    %37 = arith.subf %36, %35 : vector<2x8xf32>
    %38 = math.exp %37 : vector<2x8xf32>
    %cst_15 = arith.constant 1.000000e+00 : f32
    %39 = vector.broadcast %cst_15 : f32 to vector<2x8xf32>
    %40 = arith.addf %39, %38 : vector<2x8xf32>
    %cst_16 = arith.constant 1.000000e+00 : f32
    %41 = vector.broadcast %cst_16 : f32 to vector<2x8xf32>
    %42 = arith.divf %41, %40 : vector<2x8xf32>
    %43 = vector.shape_cast %42 : vector<2x8xf32> to vector<2x8x1xf32>
    %44 = vector.broadcast %43 : vector<2x8x1xf32> to vector<2x8x256xf32>
    %45 = arith.mulf %0, %44 : vector<2x8x256xf32>
    %c0_17 = arith.constant 0 : index
    %c0_18 = arith.constant 0 : index
    %c0_19 = arith.constant 0 : index
    %46 = vector.load %arg4[%c0_17, %c0_18, %c0_19] : memref<2x8x256xf32, #tpu.memory_space<vmem>>, vector<2x8x256xf32>
    tpu.vector_store %arg4[%c0_17, %c0_18, %c0_19], %45 {strides = array<i32>} : memref<2x8x256xf32, #tpu.memory_space<vmem>>, vector<2x8x256xf32>,
    return
  }
  func.func @transform_0(%arg0: i32) -> (i32, i32, i32) {
    %c0_i32 = arith.constant 0 : i32
    %c0_i32_0 = arith.constant 0 : i32
    %c0_i32_1 = arith.constant 0 : i32
    %c0_i32_2 = arith.constant 0 : i32
    return %c0_i32, %c0_i32_0, %c0_i32_1 : i32, i32, i32
  }
  func.func @transform_1(%arg0: i32) -> (i32, i32) {
    %c0_i32 = arith.constant 0 : i32
    %c0_i32_0 = arith.constant 0 : i32
    %c0_i32_1 = arith.constant 0 : i32
    return %c0_i32, %c0_i32_0 : i32, i32
  }
  func.func @transform_2(%arg0: i32) -> (i32, i32) {
    %c0_i32 = arith.constant 0 : i32
    %c0_i32_0 = arith.constant 0 : i32
    %c0_i32_1 = arith.constant 0 : i32
    return %c0_i32, %c0_i32_0 : i32, i32
  }
  func.func @transform_3(%arg0: i32) -> (i32, i32, i32) {
    %c0_i32 = arith.constant 0 : i32
    %c0_i32_0 = arith.constant 0 : i32
    %c0_i32_1 = arith.constant 0 : i32
    %c0_i32_2 = arith.constant 0 : i32
    return %c0_i32, %c0_i32_0, %c0_i32_1 : i32, i32, i32
  }
}

</mosaic_0001>

<llo_original>
// kernel: cbam_forward.1
$region0: #{cbam_forward.1}
  #allocation0 [shape = 'u32[]', space=smem, size = 0x4, offset = 0x4, fixed_abs, tag = 'smem constant byte address 0x4 - core index']
  #allocation1 [shape = 'u32[144,128]{1,0:T(1,128)}', space=vmem, size = 0x12000, scoped, tag = 'internal scratch']
  %s0 = inlined_call_operand.vmem [shape: f32[2,8,256], index: 0, kind: input, shape index: {}]
  %s1 = inlined_call_operand.vmem [shape: f32[4,8], index: 1, kind: input, shape index: {}]
  %s2 = inlined_call_operand.vmem [shape: f32[8,4], index: 2, kind: input, shape index: {}]
  %s3 = inlined_call_operand.vmem [shape: f32[2,8,256], index: 3, kind: output, shape index: {}]
  %s4 = sld [smem:[#allocation0]]
  $region22: #{cbam_forward.1} parent=0
    _
  %s6 = ssub.s32 1, %s4
  %s7 = scalar_select 0, %s6, %s4
  // Predicated region
  $region2: #{cbam_forward.1} parent=0 // pred_check
    _
  $region3: #{cbam_forward.1} parent=0 // pred_check_branch
    %9 = sbr.rel (0) target = $region5
  $region4: #{cbam_forward.1} parent=0 // pred_region
    _
  $region5: #{cbam_forward.1} parent=0 // pred_fallthru
    _
  // Predicated region
  $region6: #{cbam_forward.1} parent=0 // pred_check
    _
  $region7: #{cbam_forward.1} parent=0 // pred_check_branch
    %11 = sbr.rel (0) target = $region9
  $region8: #{cbam_forward.1} parent=0 // pred_region
    _
  $region9: #{cbam_forward.1} parent=0 // pred_fallthru
    _
  // Predicated region
  $region10: #{cbam_forward.1} parent=0 // pred_check
    _
  $region11: #{cbam_forward.1} parent=0 // pred_check_branch
    %13 = sbr.rel (0) target = $region13
  $region12: #{cbam_forward.1} parent=0 // pred_region
    _
  $region13: #{cbam_forward.1} parent=0 // pred_fallthru
    _
  %v14 = vld [vmem:[%s0] sm:$0xff]
  %v15 = vld [vmem:[%s0 + $0x8] sm:$0xff]
  %v16 = vld [vmem:[%s0 + $0x10] sm:$0xff]
  %v17 = vld [vmem:[%s0 + $0x18] sm:$0xff]
  %v18 = vadd.f32 %v14, %v15
  %19 = vadd.xlane.f32.xlu0 %v18
  %v20 = vpop.xlane.xlu0 %19
  %v21 = vadd.f32 %v16, %v17
  %22 = vadd.xlane.f32.xlu0 %v21
  %v23 = vpop.xlane.xlu0 %22
  %v24 = vmul.f32 %v20, 0.00390625
  %v25 = vmul.f32 %v23, 0.00390625
  %v26 = vmax.f32 %v14, %v15
  %27 = vmax.xlane.f32.xlu0 %v26
  %v28 = vpop.xlane.xlu0 %27
  %v29 = vmax.f32 %v16, %v17
  %30 = vmax.xlane.f32.xlu0 %v29
  %v31 = vpop.xlane.xlu0 %30
  %v32 = vld [vmem:[%s1] sm:$0xf]
  %v33 = vld [vmem:[%s2] sm:$0xff]
  %v35 = vlaneseq
  %v36 = vshrl.u32 %v35, 7
  %v37 = vsub.s32 0, %v36
  %v38 = vrot.slane %v32, %v37
  %40 = vbcast.lane.b32.xlu0 %v38, 256
  %v41 = vpop.permute.xlu0 %40
  %v42 = vlaneseq
  %v43 = vshrl.u32 %v42, 7
  %v44 = vsub.s32 1, %v43
  %v45 = vrot.slane %v32, %v44
  %47 = vbcast.lane.b32.xlu0 %v45, 256
  %v48 = vpop.permute.xlu0 %47
  %v49 = vlaneseq
  %v50 = vshrl.u32 %v49, 7
  %v51 = vsub.s32 2, %v50
  %v52 = vrot.slane %v32, %v51
  %54 = vbcast.lane.b32.xlu0 %v52, 256
  %v55 = vpop.permute.xlu0 %54
  %v56 = vlaneseq
  %v57 = vshrl.u32 %v56, 7
  %v58 = vsub.s32 3, %v57
  %v59 = vrot.slane %v32, %v58
  %61 = vbcast.lane.b32.xlu0 %v59, 256
  %v62 = vpop.permute.xlu0 %61
  %v67 = vmul.f32 %v24, %v41
  %v68 = vmul.f32 %v24, %v48
  %v69 = vmul.f32 %v24, %v55
  %v70 = vmul.f32 %v24, %v62
  %v71 = vmul.f32 %v25, %v41
  %v72 = vmul.f32 %v25, %v48
  %v73 = vmul.f32 %v25, %v55
  %v74 = vmul.f32 %v25, %v62
  %83 = vset.pattern.permute.xlu0 0
  %84 = vperm.xlu0 %83, %v67
  %v85 = vpop.permute.xlu0 %84
  %86 = vset.pattern.permute.xlu0 0
  %87 = vperm.xlu0 %86, %v68
  %v88 = vpop.permute.xlu0 %87
  %89 = vset.pattern.permute.xlu0 0
  %90 = vperm.xlu0 %89, %v69
  %v91 = vpop.permute.xlu0 %90
  %92 = vset.pattern.permute.xlu0 0
  %93 = vperm.xlu0 %92, %v70
  %v94 = vpop.permute.xlu0 %93
  %95 = vset.pattern.permute.xlu0 0
  %96 = vperm.xlu0 %95, %v71
  %v97 = vpop.permute.xlu0 %96
  %98 = vset.pattern.permute.xlu0 0
  %99 = vperm.xlu0 %98, %v72
  %v100 = vpop.permute.xlu0 %99
  %101 = vset.pattern.permute.xlu0 0
  %102 = vperm.xlu0 %101, %v73
  %v103 = vpop.permute.xlu0 %102
  %104 = vset.pattern.permute.xlu0 0
  %105 = vperm.xlu0 %104, %v74
  %v106 = vpop.permute.xlu0 %105
  %v107 = vlaneseq
  %v108 = vand.u32 %v107, 127
  %v109 = vlaneseq
  %v110 = vshrl.u32 %v109, 7
  %v111 = vsub.s32 %v108, %v110
  %v112 = vrot.slane %v85, %v111
  %v113 = vlaneseq
  %v114 = vshrl.u32 %v113, 7
  %v115 = vsub.s32 %v108, %v114
  %v116 = vrot.slane %v88, %v115
  %v117 = vlaneseq
  %v118 = vshrl.u32 %v117, 7
  %v119 = vsub.s32 %v108, %v118
  %v120 = vrot.slane %v91, %v119
  %v121 = vlaneseq
  %v122 = vshrl.u32 %v121, 7
  %v123 = vsub.s32 %v108, %v122
  %v124 = vrot.slane %v94, %v123
  %v125 = vlaneseq
  %v126 = vshrl.u32 %v125, 7
  %v127 = vsub.s32 %v108, %v126
  %v128 = vrot.slane %v97, %v127
  %v129 = vlaneseq
  %v130 = vshrl.u32 %v129, 7
  %v131 = vsub.s32 %v108, %v130
  %v132 = vrot.slane %v100, %v131
  %v133 = vlaneseq
  %v134 = vshrl.u32 %v133, 7
  %v135 = vsub.s32 %v108, %v134
  %v136 = vrot.slane %v103, %v135
  %v137 = vlaneseq
  %v138 = vshrl.u32 %v137, 7
  %v139 = vsub.s32 %v108, %v138
  %v140 = vrot.slane %v106, %v139
  %vm141 = vcmask 1041409
  %v142 = vsel %vm141, %v116, %v112
  %vm143 = vcmask 1042434
  %v144 = vsel %vm143, %v120, %v142
  %vm145 = vcmask 1043459
  %v146 = vsel %vm145, %v124, %v144
  %v147 = vsel %vm141, %v132, %v128
  %v148 = vsel %vm143, %v136, %v147
  %v149 = vsel %vm145, %v140, %v148
  %vm152 = vcmask 60416
  %v153 = vsel %vm152, %v146, 0.0
  %154 = vadd.xlane.f32.xlu0 %v153
  %v155 = vpop.xlane.xlu0 %154
  %v156 = vsel %vm152, %v149, 0.0
  %157 = vadd.xlane.f32.xlu0 %v156
  %v158 = vpop.xlane.xlu0 %157
  %v159 = vmax.f32 %v155, 0.0
  %v160 = vmax.f32 %v158, 0.0
  %v162 = vlaneseq
  %v163 = vshrl.u32 %v162, 7
  %v164 = vsub.s32 0, %v163
  %v165 = vrot.slane %v33, %v164
  %167 = vbcast.lane.b32.xlu0 %v165, 256
  %v168 = vpop.permute.xlu0 %167
  %v169 = vlaneseq
  %v170 = vshrl.u32 %v169, 7
  %v171 = vsub.s32 1, %v170
  %v172 = vrot.slane %v33, %v171
  %174 = vbcast.lane.b32.xlu0 %v172, 256
  %v175 = vpop.permute.xlu0 %174
  %v176 = vlaneseq
  %v177 = vshrl.u32 %v176, 7
  %v178 = vsub.s32 2, %v177
  %v179 = vrot.slane %v33, %v178
  %181 = vbcast.lane.b32.xlu0 %v179, 256
  %v182 = vpop.permute.xlu0 %181
  %v183 = vlaneseq
  %v184 = vshrl.u32 %v183, 7
  %v185 = vsub.s32 3, %v184
  %v186 = vrot.slane %v33, %v185
  %188 = vbcast.lane.b32.xlu0 %v186, 256
  %v189 = vpop.permute.xlu0 %188
  %v190 = vlaneseq
  %v191 = vshrl.u32 %v190, 7
  %v192 = vsub.s32 4, %v191
  %v193 = vrot.slane %v33, %v192
  %195 = vbcast.lane.b32.xlu0 %v193, 256
  %v196 = vpop.permute.xlu0 %195
  %v197 = vlaneseq
  %v198 = vshrl.u32 %v197, 7
  %v199 = vsub.s32 5, %v198
  %v200 = vrot.slane %v33, %v199
  %202 = vbcast.lane.b32.xlu0 %v200, 256
  %v203 = vpop.permute.xlu0 %202
  %v204 = vlaneseq
  %v205 = vshrl.u32 %v204, 7
  %v206 = vsub.s32 6, %v205
  %v207 = vrot.slane %v33, %v206
  %209 = vbcast.lane.b32.xlu0 %v207, 256
  %v210 = vpop.permute.xlu0 %209
  %v211 = vlaneseq
  %v212 = vshrl.u32 %v211, 7
  %v213 = vsub.s32 7, %v212
  %v214 = vrot.slane %v33, %v213
  %216 = vbcast.lane.b32.xlu0 %v214, 256
  %v217 = vpop.permute.xlu0 %216
  %v226 = vmul.f32 %v159, %v168
  %v227 = vmul.f32 %v159, %v175
  %v228 = vmul.f32 %v159, %v182
  %v229 = vmul.f32 %v159, %v189
  %v230 = vmul.f32 %v159, %v196
  %v231 = vmul.f32 %v159, %v203
  %v232 = vmul.f32 %v159, %v210
  %v233 = vmul.f32 %v159, %v217
  %v234 = vmul.f32 %v160, %v168
  %v235 = vmul.f32 %v160, %v175
  %v236 = vmul.f32 %v160, %v182
  %v237 = vmul.f32 %v160, %v189
  %v238 = vmul.f32 %v160, %v196
  %v239 = vmul.f32 %v160, %v203
  %v240 = vmul.f32 %v160, %v210
  %v241 = vmul.f32 %v160, %v217
  %258 = vset.pattern.permute.xlu0 0
  %259 = vperm.xlu0 %258, %v226
  %v260 = vpop.permute.xlu0 %259
  %261 = vset.pattern.permute.xlu0 0
  %262 = vperm.xlu0 %261, %v227
  %v263 = vpop.permute.xlu0 %262
  %264 = vset.pattern.permute.xlu0 0
  %265 = vperm.xlu0 %264, %v228
  %v266 = vpop.permute.xlu0 %265
  %267 = vset.pattern.permute.xlu0 0
  %268 = vperm.xlu0 %267, %v229
  %v269 = vpop.permute.xlu0 %268
  %270 = vset.pattern.permute.xlu0 0
  %271 = vperm.xlu0 %270, %v230
  %v272 = vpop.permute.xlu0 %271
  %273 = vset.pattern.permute.xlu0 0
  %274 = vperm.xlu0 %273, %v231
  %v275 = vpop.permute.xlu0 %274
  %276 = vset.pattern.permute.xlu0 0
  %277 = vperm.xlu0 %276, %v232
  %v278 = vpop.permute.xlu0 %277
  %279 = vset.pattern.permute.xlu0 0
  %280 = vperm.xlu0 %279, %v233
  %v281 = vpop.permute.xlu0 %280
  %282 = vset.pattern.permute.xlu0 0
  %283 = vperm.xlu0 %282, %v234
  %v284 = vpop.permute.xlu0 %283
  %285 = vset.pattern.permute.xlu0 0
  %286 = vperm.xlu0 %285, %v235
  %v287 = vpop.permute.xlu0 %286
  %288 = vset.pattern.permute.xlu0 0
  %289 = vperm.xlu0 %288, %v236
  %v290 = vpop.permute.xlu0 %289
  %291 = vset.pattern.permute.xlu0 0
  %292 = vperm.xlu0 %291, %v237
  %v293 = vpop.permute.xlu0 %292
  %294 = vset.pattern.permute.xlu0 0
  %295 = vperm.xlu0 %294, %v238
  %v296 = vpop.permute.xlu0 %295
  %297 = vset.pattern.permute.xlu0 0
  %298 = vperm.xlu0 %297, %v239
  %v299 = vpop.permute.xlu0 %298
  %300 = vset.pattern.permute.xlu0 0
  %301 = vperm.xlu0 %300, %v240
  %v302 = vpop.permute.xlu0 %301
  %303 = vset.pattern.permute.xlu0 0
  %304 = vperm.xlu0 %303, %v241
  %v305 = vpop.permute.xlu0 %304
  %v306 = vlaneseq
  %v307 = vshrl.u32 %v306, 7
  %v308 = vsub.s32 %v108, %v307
  %v309 = vrot.slane %v260, %v308
  %v310 = vlaneseq
  %v311 = vshrl.u32 %v310, 7
  %v312 = vsub.s32 %v108, %v311
  %v313 = vrot.slane %v263, %v312
  %v314 = vlaneseq
  %v315 = vshrl.u32 %v314, 7
  %v316 = vsub.s32 %v108, %v315
  %v317 = vrot.slane %v266, %v316
  %v318 = vlaneseq
  %v319 = vshrl.u32 %v318, 7
  %v320 = vsub.s32 %v108, %v319
  %v321 = vrot.slane %v269, %v320
  %v322 = vlaneseq
  %v323 = vshrl.u32 %v322, 7
  %v324 = vsub.s32 %v108, %v323
  %v325 = vrot.slane %v272, %v324
  %v326 = vlaneseq
  %v327 = vshrl.u32 %v326, 7
  %v328 = vsub.s32 %v108, %v327
  %v329 = vrot.slane %v275, %v328
  %v330 = vlaneseq
  %v331 = vshrl.u32 %v330, 7
  %v332 = vsub.s32 %v108, %v331
  %v333 = vrot.slane %v278, %v332
  %v334 = vlaneseq
  %v335 = vshrl.u32 %v334, 7
  %v336 = vsub.s32 %v108, %v335
  %v337 = vrot.slane %v281, %v336
  %v338 = vlaneseq
  %v339 = vshrl.u32 %v338, 7
  %v340 = vsub.s32 %v108, %v339
  %v341 = vrot.slane %v284, %v340
  %v342 = vlaneseq
  %v343 = vshrl.u32 %v342, 7
  %v344 = vsub.s32 %v108, %v343
  %v345 = vrot.slane %v287, %v344
  %v346 = vlaneseq
  %v347 = vshrl.u32 %v346, 7
  %v348 = vsub.s32 %v108, %v347
  %v349 = vrot.slane %v290, %v348
  %v350 = vlaneseq
  %v351 = vshrl.u32 %v350, 7
  %v352 = vsub.s32 %v108, %v351
  %v353 = vrot.slane %v293, %v352
  %v354 = vlaneseq
  %v355 = vshrl.u32 %v354, 7
  %v356 = vsub.s32 %v108, %v355
  %v357 = vrot.slane %v296, %v356
  %v358 = vlaneseq
  %v359 = vshrl.u32 %v358, 7
  %v360 = vsub.s32 %v108, %v359
  %v361 = vrot.slane %v299, %v360
  %v362 = vlaneseq
  %v363 = vshrl.u32 %v362, 7
  %v364 = vsub.s32 %v108, %v363
  %v365 = vrot.slane %v302, %v364
  %v366 = vlaneseq
  %v367 = vshrl.u32 %v366, 7
  %v368 = vsub.s32 %v108, %v367
  %v369 = vrot.slane %v305, %v368
  %v370 = vsel %vm141, %v313, %v309
  %v371 = vsel %vm143, %v317, %v370
  %v372 = vsel %vm145, %v321, %v371
  %vm373 = vcmask 1044484
  %v374 = vsel %vm373, %v325, %v372
  %vm375 = vcmask 1045509
  %v376 = vsel %vm375, %v329, %v374
  %vm377 = vcmask 1046534
  %v378 = vsel %vm377, %v333, %v376
  %vm379 = vcmask 1047559
  %v380 = vsel %vm379, %v337, %v378
  %v381 = vsel %vm141, %v345, %v341
  %v382 = vsel %vm143, %v349, %v381
  %v383 = vsel %vm145, %v353, %v382
  %v384 = vsel %vm373, %v357, %v383
  %v385 = vsel %vm375, %v361, %v384
  %v386 = vsel %vm377, %v365, %v385
  %v387 = vsel %vm379, %v369, %v386
  %vm390 = vcmask 31744
  %v391 = vsel %vm390, %v380, 0.0
  %392 = vadd.xlane.f32.xlu0 %v391
  %v393 = vpop.xlane.xlu0 %392
  %v394 = vsel %vm390, %v387, 0.0
  %395 = vadd.xlane.f32.xlu0 %v394
  %v396 = vpop.xlane.xlu0 %395
  %v397 = vmul.f32 %v28, %v41
  %v398 = vmul.f32 %v28, %v48
  %v399 = vmul.f32 %v28, %v55
  %v400 = vmul.f32 %v28, %v62
  %v401 = vmul.f32 %v31, %v41
  %v402 = vmul.f32 %v31, %v48
  %v403 = vmul.f32 %v31, %v55
  %v404 = vmul.f32 %v31, %v62
  %413 = vset.pattern.permute.xlu0 0
  %414 = vperm.xlu0 %413, %v397
  %v415 = vpop.permute.xlu0 %414
  %416 = vset.pattern.permute.xlu0 0
  %417 = vperm.xlu0 %416, %v398
  %v418 = vpop.permute.xlu0 %417
  %419 = vset.pattern.permute.xlu0 0
  %420 = vperm.xlu0 %419, %v399
  %v421 = vpop.permute.xlu0 %420
  %422 = vset.pattern.permute.xlu0 0
  %423 = vperm.xlu0 %422, %v400
  %v424 = vpop.permute.xlu0 %423
  %425 = vset.pattern.permute.xlu0 0
  %426 = vperm.xlu0 %425, %v401
  %v427 = vpop.permute.xlu0 %426
  %428 = vset.pattern.permute.xlu0 0
  %429 = vperm.xlu0 %428, %v402
  %v430 = vpop.permute.xlu0 %429
  %431 = vset.pattern.permute.xlu0 0
  %432 = vperm.xlu0 %431, %v403
  %v433 = vpop.permute.xlu0 %432
  %434 = vset.pattern.permute.xlu0 0
  %435 = vperm.xlu0 %434, %v404
  %v436 = vpop.permute.xlu0 %435
  %v437 = vlaneseq
  %v438 = vshrl.u32 %v437, 7
  %v439 = vsub.s32 %v108, %v438
  %v440 = vrot.slane %v415, %v439
  %v441 = vlaneseq
  %v442 = vshrl.u32 %v441, 7
  %v443 = vsub.s32 %v108, %v442
  %v444 = vrot.slane %v418, %v443
  %v445 = vlaneseq
  %v446 = vshrl.u32 %v445, 7
  %v447 = vsub.s32 %v108, %v446
  %v448 = vrot.slane %v421, %v447
  %v449 = vlaneseq
  %v450 = vshrl.u32 %v449, 7
  %v451 = vsub.s32 %v108, %v450
  %v452 = vrot.slane %v424, %v451
  %v453 = vlaneseq
  %v454 = vshrl.u32 %v453, 7
  %v455 = vsub.s32 %v108, %v454
  %v456 = vrot.slane %v427, %v455
  %v457 = vlaneseq
  %v458 = vshrl.u32 %v457, 7
  %v459 = vsub.s32 %v108, %v458
  %v460 = vrot.slane %v430, %v459
  %v461 = vlaneseq
  %v462 = vshrl.u32 %v461, 7
  %v463 = vsub.s32 %v108, %v462
  %v464 = vrot.slane %v433, %v463
  %v465 = vlaneseq
  %v466 = vshrl.u32 %v465, 7
  %v467 = vsub.s32 %v108, %v466
  %v468 = vrot.slane %v436, %v467
  %v469 = vsel %vm141, %v444, %v440
  %v470 = vsel %vm143, %v448, %v469
  %v471 = vsel %vm145, %v452, %v470
  %v472 = vsel %vm141, %v460, %v456
  %v473 = vsel %vm143, %v464, %v472
  %v474 = vsel %vm145, %v468, %v473
  %v477 = vsel %vm152, %v471, 0.0
  %478 = vadd.xlane.f32.xlu0 %v477
  %v479 = vpop.xlane.xlu0 %478
  %v480 = vsel %vm152, %v474, 0.0
  %481 = vadd.xlane.f32.xlu0 %v480
  %v482 = vpop.xlane.xlu0 %481
  %v483 = vmax.f32 %v479, 0.0
  %v484 = vmax.f32 %v482, 0.0
  %v485 = vmul.f32 %v483, %v168
  %v486 = vmul.f32 %v483, %v175
  %v487 = vmul.f32 %v483, %v182
  %v488 = vmul.f32 %v483, %v189
  %v489 = vmul.f32 %v483, %v196
  %v490 = vmul.f32 %v483, %v203
  %v491 = vmul.f32 %v483, %v210
  %v492 = vmul.f32 %v483, %v217
  %v493 = vmul.f32 %v484, %v168
  %v494 = vmul.f32 %v484, %v175
  %v495 = vmul.f32 %v484, %v182
  %v496 = vmul.f32 %v484, %v189
  %v497 = vmul.f32 %v484, %v196
  %v498 = vmul.f32 %v484, %v203
  %v499 = vmul.f32 %v484, %v210
  %v500 = vmul.f32 %v484, %v217
  %517 = vset.pattern.permute.xlu0 0
  %518 = vperm.xlu0 %517, %v485
  %v519 = vpop.permute.xlu0 %518
  %520 = vset.pattern.permute.xlu0 0
  %521 = vperm.xlu0 %520, %v486
  %v522 = vpop.permute.xlu0 %521
  %523 = vset.pattern.permute.xlu0 0
  %524 = vperm.xlu0 %523, %v487
  %v525 = vpop.permute.xlu0 %524
  %526 = vset.pattern.permute.xlu0 0
  %527 = vperm.xlu0 %526, %v488
  %v528 = vpop.permute.xlu0 %527
  %529 = vset.pattern.permute.xlu0 0
  %530 = vperm.xlu0 %529, %v489
  %v531 = vpop.permute.xlu0 %530
  %532 = vset.pattern.permute.xlu0 0
  %533 = vperm.xlu0 %532, %v490
  %v534 = vpop.permute.xlu0 %533
  %535 = vset.pattern.permute.xlu0 0
  %536 = vperm.xlu0 %535, %v491
  %v537 = vpop.permute.xlu0 %536
  %538 = vset.pattern.permute.xlu0 0
  %539 = vperm.xlu0 %538, %v492
  %v540 = vpop.permute.xlu0 %539
  %541 = vset.pattern.permute.xlu0 0
  %542 = vperm.xlu0 %541, %v493
  %v543 = vpop.permute.xlu0 %542
  %544 = vset.pattern.permute.xlu0 0
  %545 = vperm.xlu0 %544, %v494
  %v546 = vpop.permute.xlu0 %545
  %547 = vset.pattern.permute.xlu0 0
  %548 = vperm.xlu0 %547, %v495
  %v549 = vpop.permute.xlu0 %548
  %550 = vset.pattern.permute.xlu0 0
  %551 = vperm.xlu0 %550, %v496
  %v552 = vpop.permute.xlu0 %551
  %553 = vset.pattern.permute.xlu0 0
  %554 = vperm.xlu0 %553, %v497
  %v555 = vpop.permute.xlu0 %554
  %556 = vset.pattern.permute.xlu0 0
  %557 = vperm.xlu0 %556, %v498
  %v558 = vpop.permute.xlu0 %557
  %559 = vset.pattern.permute.xlu0 0
  %560 = vperm.xlu0 %559, %v499
  %v561 = vpop.permute.xlu0 %560
  %562 = vset.pattern.permute.xlu0 0
  %563 = vperm.xlu0 %562, %v500
  %v564 = vpop.permute.xlu0 %563
  %v565 = vlaneseq
  %v566 = vshrl.u32 %v565, 7
  %v567 = vsub.s32 %v108, %v566
  %v568 = vrot.slane %v519, %v567
  %v569 = vlaneseq
  %v570 = vshrl.u32 %v569, 7
  %v571 = vsub.s32 %v108, %v570
  %v572 = vrot.slane %v522, %v571
  %v573 = vlaneseq
  %v574 = vshrl.u32 %v573, 7
  %v575 = vsub.s32 %v108, %v574
  %v576 = vrot.slane %v525, %v575
  %v577 = vlaneseq
  %v578 = vshrl.u32 %v577, 7
  %v579 = vsub.s32 %v108, %v578
  %v580 = vrot.slane %v528, %v579
  %v581 = vlaneseq
  %v582 = vshrl.u32 %v581, 7
  %v583 = vsub.s32 %v108, %v582
  %v584 = vrot.slane %v531, %v583
  %v585 = vlaneseq
  %v586 = vshrl.u32 %v585, 7
  %v587 = vsub.s32 %v108, %v586
  %v588 = vrot.slane %v534, %v587
  %v589 = vlaneseq
  %v590 = vshrl.u32 %v589, 7
  %v591 = vsub.s32 %v108, %v590
  %v592 = vrot.slane %v537, %v591
  %v593 = vlaneseq
  %v594 = vshrl.u32 %v593, 7
  %v595 = vsub.s32 %v108, %v594
  %v596 = vrot.slane %v540, %v595
  %v597 = vlaneseq
  %v598 = vshrl.u32 %v597, 7
  %v599 = vsub.s32 %v108, %v598
  %v600 = vrot.slane %v543, %v599
  %v601 = vlaneseq
  %v602 = vshrl.u32 %v601, 7
  %v603 = vsub.s32 %v108, %v602
  %v604 = vrot.slane %v546, %v603
  %v605 = vlaneseq
  %v606 = vshrl.u32 %v605, 7
  %v607 = vsub.s32 %v108, %v606
  %v608 = vrot.slane %v549, %v607
  %v609 = vlaneseq
  %v610 = vshrl.u32 %v609, 7
  %v611 = vsub.s32 %v108, %v610
  %v612 = vrot.slane %v552, %v611
  %v613 = vlaneseq
  %v614 = vshrl.u32 %v613, 7
  %v615 = vsub.s32 %v108, %v614
  %v616 = vrot.slane %v555, %v615
  %v617 = vlaneseq
  %v618 = vshrl.u32 %v617, 7
  %v619 = vsub.s32 %v108, %v618
  %v620 = vrot.slane %v558, %v619
  %v621 = vlaneseq
  %v622 = vshrl.u32 %v621, 7
  %v623 = vsub.s32 %v108, %v622
  %v624 = vrot.slane %v561, %v623
  %v625 = vlaneseq
  %v626 = vshrl.u32 %v625, 7
  %v627 = vsub.s32 %v108, %v626
  %v628 = vrot.slane %v564, %v627
  %v629 = vsel %vm141, %v572, %v568
  %v630 = vsel %vm143, %v576, %v629
  %v631 = vsel %vm145, %v580, %v630
  %v632 = vsel %vm373, %v584, %v631
  %v633 = vsel %vm375, %v588, %v632
  %v634 = vsel %vm377, %v592, %v633
  %v635 = vsel %vm379, %v596, %v634
  %v636 = vsel %vm141, %v604, %v600
  %v637 = vsel %vm143, %v608, %v636
  %v638 = vsel %vm145, %v612, %v637
  %v639 = vsel %vm373, %v616, %v638
  %v640 = vsel %vm375, %v620, %v639
  %v641 = vsel %vm377, %v624, %v640
  %v642 = vsel %vm379, %v628, %v641
  %v645 = vsel %vm390, %v635, 0.0
  %646 = vadd.xlane.f32.xlu0 %v645
  %v647 = vpop.xlane.xlu0 %646
  %v648 = vsel %vm390, %v642, 0.0
  %649 = vadd.xlane.f32.xlu0 %v648
  %v650 = vpop.xlane.xlu0 %649
  %v651 = vmul.f32 %v393, %v647
  %v652 = vmul.f32 %v396, %v650
  %v653 = vsub.f32 0.0, %v651
  %v654 = vsub.f32 0.0, %v652
  %v655 = vmul.f32 %v653, 1.442695
  %v656 = vpow.pop %v655
  %v657 = vmul.f32 %v654, 1.442695
  %v658 = vpow.pop %v657
  %v659 = vadd.f32 %v656, 1.0
  %v660 = vadd.f32 %v658, 1.0
  %v661 = vrcp.pop %v659
  %v662 = vmul.f32 1.0, %v661
  %v663 = vrcp.pop %v660
  %v664 = vmul.f32 1.0, %v663
  %v665 = vmul.f32 %v14, %v662
  %v666 = vmul.f32 %v15, %v662
  %v667 = vmul.f32 %v16, %v664
  %v668 = vmul.f32 %v17, %v664
  %669 = vst [vmem:[%s3] sm:$0xff] %v665
  %670 = vst [vmem:[%s3 + $0x8] sm:$0xff] %v666
  %671 = vst [vmem:[%s3 + $0x10] sm:$0xff] %v667
  %672 = vst [vmem:[%s3 + $0x18] sm:$0xff] %v668
  // Predicated region
  $region14: #{cbam_forward.1} parent=0 // pred_check
    _
  $region15: #{cbam_forward.1} parent=0 // pred_check_branch
    %674 = sbr.rel (0) target = $region17
  $region16: #{cbam_forward.1} parent=0 // pred_region
    _
  $region17: #{cbam_forward.1} parent=0 // pred_fallthru
    _
  // Predicated region
  $region18: #{cbam_forward.1} parent=0 // pred_check
    _
  $region19: #{cbam_forward.1} parent=0 // pred_check_branch
    %676 = sbr.rel (0) target = $region21
  $region20: #{cbam_forward.1} parent=0 // pred_region
    _
  $region21: #{cbam_forward.1} parent=0 // pred_fallthru
    _

</llo_original>
